<compile_context>
chip_gen: v7x
topology: tpu7x:2x2x1
jax: 0.10.0
libtpu: 0.0.40
codegen_flags: <defaults>
</compile_context>

<pallas_src>
import functools

import jax
import jax.numpy as jnp
from jax.experimental import pallas as pl
from jax.experimental.pallas import tpu as pltpu

NEG_SLOPE = 0.01  # PyTorch nn.LeakyReLU default


def _leaky_relu(x):
    return jnp.where(x >= 0, x, NEG_SLOPE * x)


def entropy_params_kernel(x_ref, w1_ref, b1_ref, w2_ref, b2_ref, w3_ref, b3_ref,
                          o_ref, *, compute_dtype):
    # x_ref:  (1, C_in, T)   spatial tile of one batch element (bf16)
    # w*_ref: (C_out_l, C_in_l) transposed weights (bf16), resident full blocks
    # b*_ref: (C_out_l, 1)   biases (f32), broadcast along the lane axis
    x = x_ref[0]                                                   # (C_in, T)

    h = jnp.dot(w1_ref[...], x, preferred_element_type=jnp.float32)
    h = _leaky_relu(h + b1_ref[...]).astype(compute_dtype)

    h = jnp.dot(w2_ref[...], h, preferred_element_type=jnp.float32)
    h = _leaky_relu(h + b2_ref[...]).astype(compute_dtype)

    out = jnp.dot(w3_ref[...], h, preferred_element_type=jnp.float32) + b3_ref[...]
    o_ref[0] = out.astype(o_ref.dtype)                             # (C_out, T)


def _pick_spatial_tile(hw, c_in, c_mid, c_out, in_bytes, out_bytes,
                       max_tile=2048, budget_bytes=20 << 20):
    """Largest lane tile (multiple of 128) whose VMEM footprint fits the budget."""
    # Per lane column: double-buffered x block + double-buffered out block +
    # live f32 intermediates (~2 * C_mid) during the three matmuls.
    per_col = 2 * c_in * in_bytes + 2 * c_out * out_bytes + 2 * c_mid * 4
    tile = min(max_tile, max(128, (budget_bytes // per_col) // 128 * 128))
    if hw <= tile:
        return hw  # whole spatial extent in one block (full-dim -> no 128 constraint)
    return tile


def entropy_parameters_forward(x_nchw, params, *, compute_dtype=jnp.bfloat16):
    """x_nchw: (B, C_in, H, W); params: dict of w1,b1,w2,b2,w3,b3 (wk: (Cin,Cout))."""
    w1, b1, w2, b2, w3, b3 = (params[k] for k in ("w1", "b1", "w2", "b2", "w3", "b3"))
    B, C_in, H, W = x_nchw.shape
    C_mid = w1.shape[1]
    C_out = w3.shape[1]
    hw = H * W

    # One-time tiny weight prep: transpose to (C_out_l, C_in_l), cast to bf16.
    w1t = jnp.asarray(w1.T, compute_dtype)
    w2t = jnp.asarray(w2.T, compute_dtype)
    w3t = jnp.asarray(w3.T, compute_dtype)
    b1c = jnp.asarray(b1, jnp.float32).reshape(C_mid, 1)
    b2c = jnp.asarray(b2, jnp.float32).reshape(C_mid, 1)
    b3c = jnp.asarray(b3, jnp.float32).reshape(C_out, 1)

    # NCHW -> (B, C_in, H*W): pure reshape, no transpose / extra HBM pass.
    x3d = x_nchw.reshape(B, C_in, hw).astype(compute_dtype)

    out_dtype = x_nchw.dtype
    tile = _pick_spatial_tile(
        hw, C_in, C_mid, C_out,
        in_bytes=jnp.dtype(compute_dtype).itemsize,
        out_bytes=jnp.dtype(out_dtype).itemsize)
    hw_pad = pl.cdiv(hw, tile) * tile
    if hw_pad != hw:
        x3d = jnp.pad(x3d, ((0, 0), (0, 0), (0, hw_pad - hw)))

    grid = (B, hw_pad // tile)
    full = lambda b, t: (0, 0)  # weights / biases: single resident full block

    out3d = pl.pallas_call(
        functools.partial(entropy_params_kernel, compute_dtype=compute_dtype),
        out_shape=jax.ShapeDtypeStruct((B, C_out, hw_pad), out_dtype),
        grid_spec=pltpu.PrefetchScalarGridSpec(
            num_scalar_prefetch=0,
            grid=grid,
            in_specs=[
                pl.BlockSpec((1, C_in, tile), lambda b, t: (b, 0, t)),
                pl.BlockSpec(w1t.shape, full),
                pl.BlockSpec(b1c.shape, full),
                pl.BlockSpec(w2t.shape, full),
                pl.BlockSpec(b2c.shape, full),
                pl.BlockSpec(w3t.shape, full),
                pl.BlockSpec(b3c.shape, full),
            ],
            out_specs=pl.BlockSpec((1, C_out, tile), lambda b, t: (b, 0, t)),
        ),
        compiler_params=pltpu.CompilerParams(
            dimension_semantics=("parallel", "parallel")),
    )(x3d, w1t, b1c, w2t, b2c, w3t, b3c)

    if hw_pad != hw:
        out3d = out3d[:, :, :hw]
    # (B, C_out, H*W) -> NCHW: pure reshape, no transpose.
    return out3d.reshape(B, C_out, H, W)


def init_params(key, N, K, dtype=jnp.float32):
    c_in = N * 12 // 3
    c_mid = N * 10 // 3
    c_out = 3 * N * K
    ks = jax.random.split(key, 6)

    def lin(kw, kb, fan_in, fan_out):
        scale = 1.0 / jnp.sqrt(fan_in)
        w = jax.random.uniform(kw, (fan_in, fan_out), dtype, -scale, scale)
        b = jax.random.uniform(kb, (1, fan_out), dtype, -scale, scale)
        return w, b

    w1, b1 = lin(ks[0], ks[1], c_in, c_mid)
    w2, b2 = lin(ks[2], ks[3], c_mid, c_mid)
    w3, b3 = lin(ks[4], ks[5], c_mid, c_out)
    return {"w1": w1, "b1": b1, "w2": w2, "b2": b2, "w3": w3, "b3": b3}


def reference_forward(x_nchw, params, compute_dtype=jnp.bfloat16):
    """Pure-JAX reference mimicking the kernel's bf16-in / f32-accumulate math."""
    f32 = jnp.float32
    B, C_in, H, W = x_nchw.shape
    x2d = jnp.transpose(x_nchw, (0, 2, 3, 1)).reshape(-1, C_in)
    x2d = x2d.astype(compute_dtype).astype(f32)
    w1 = params["w1"].astype(compute_dtype).astype(f32)
    w2 = params["w2"].astype(compute_dtype).astype(f32)
    w3 = params["w3"].astype(compute_dtype).astype(f32)
    h = _leaky_relu(x2d @ w1 + params["b1"]).astype(compute_dtype).astype(f32)
    h = _leaky_relu(h @ w2 + params["b2"]).astype(compute_dtype).astype(f32)
    o = (h @ w3 + params["b3"]).astype(x_nchw.dtype)
    return jnp.transpose(o.reshape(B, H, W, -1), (0, 3, 1, 2))


if __name__ == "__main__":
    # Small config: N=24, K=3  ->  C_in=96, C_mid=80, C_out=216
    N, K = 24, 3
    B, Hs, Ws = 2, 16, 16
    C_in = N * 12 // 3

    key = jax.random.PRNGKey(0)
    kx, kp = jax.random.split(key)
    x = jax.random.normal(kx, (B, C_in, Hs, Ws), jnp.float32)
    params = init_params(kp, N, K)

    out = entropy_parameters_forward(x, params)
    out = jax.block_until_ready(out)

    ref = reference_forward(x, params)
    assert out.shape == (B, 3 * N * K, Hs, Ws)
    assert jnp.allclose(out, ref, atol=1e-2, rtol=1e-2), float(
        jnp.max(jnp.abs(out - ref)))
    print("KERNEL_OK")
</pallas_src>

<mosaic_0001>
module attributes {stable_mosaic.version = 11 : i64} {
  func.func @entropy_params_kernel(%arg0: i32, %arg1: i32, %arg2: memref<1x96x256xbf16, #tpu.memory_space<vmem>>, %arg3: memref<80x96xbf16, #tpu.memory_space<vmem>>, %arg4: memref<80x1xf32, #tpu.memory_space<vmem>>, %arg5: memref<80x80xbf16, #tpu.memory_space<vmem>>, %arg6: memref<80x1xf32, #tpu.memory_space<vmem>>, %arg7: memref<216x80xbf16, #tpu.memory_space<vmem>>, %arg8: memref<216x1xf32, #tpu.memory_space<vmem>>, %arg9: memref<1x216x256xf32, #tpu.memory_space<vmem>>) attributes {dimension_semantics = [#tpu.dimension_semantics<parallel>, #tpu.dimension_semantics<parallel>], iteration_bounds = array<i64: 2, 1>, scalar_prefetch = 0 : i64, scratch_operands = 0 : i64, tpu.core_type = #tpu.core_type<tc>, window_params = [{transform_indices = @transform_0, window_bounds = array<i64: 1, 96, 256>}, {pipeline_mode = #tpu.pipeline_mode<synchronous>, transform_indices = @transform_1, window_bounds = array<i64: 80, 96>}, {pipeline_mode = #tpu.pipeline_mode<synchronous>, transform_indices = @transform_2, window_bounds = array<i64: 80, 1>}, {pipeline_mode = #tpu.pipeline_mode<synchronous>, transform_indices = @transform_3, window_bounds = array<i64: 80, 80>}, {pipeline_mode = #tpu.pipeline_mode<synchronous>, transform_indices = @transform_4, window_bounds = array<i64: 80, 1>}, {pipeline_mode = #tpu.pipeline_mode<synchronous>, transform_indices = @transform_5, window_bounds = array<i64: 216, 80>}, {pipeline_mode = #tpu.pipeline_mode<synchronous>, transform_indices = @transform_6, window_bounds = array<i64: 216, 1>}, {transform_indices = @transform_7, window_bounds = array<i64: 1, 216, 256>}]} {
    %c0 = arith.constant 0 : index
    %c0_0 = arith.constant 0 : index
    %c0_1 = arith.constant 0 : index
    %0 = vector.load %arg2[%c0, %c0_0, %c0_1] : memref<1x96x256xbf16, #tpu.memory_space<vmem>>, vector<1x96x256xbf16>
    %1 = vector.shape_cast %0 : vector<1x96x256xbf16> to vector<96x256xbf16>
    %c0_2 = arith.constant 0 : index
    %c0_3 = arith.constant 0 : index
    %2 = vector.load %arg3[%c0_2, %c0_3] : memref<80x96xbf16, #tpu.memory_space<vmem>>, vector<80x96xbf16>
    %cst = arith.constant dense<0.000000e+00> : vector<80x256xf32>
    %3 = tpu.matmul %2, %1, %cst {dimension_numbers = #tpu.dot_dimension_numbers<[1], [0], [0], [1], [0, 0, 1, 1], [], []>} : vector<80x96xbf16>, vector<96x256xbf16>, vector<80x256xf32> -> vector<80x256xf32>
    %c0_4 = arith.constant 0 : index
    %c0_5 = arith.constant 0 : index
    %4 = vector.load %arg4[%c0_4, %c0_5] : memref<80x1xf32, #tpu.memory_space<vmem>>, vector<80x1xf32>
    %5 = vector.broadcast %4 : vector<80x1xf32> to vector<80x256xf32>
    %6 = arith.addf %3, %5 : vector<80x256xf32>
    %cst_6 = arith.constant 0.000000e+00 : f32
    %7 = vector.broadcast %cst_6 : f32 to vector<80x256xf32>
    %8 = arith.cmpf oge, %6, %7 : vector<80x256xf32>
    %cst_7 = arith.constant 0.00999999977 : f32
    %9 = vector.broadcast %cst_7 : f32 to vector<80x256xf32>
    %10 = arith.mulf %9, %6 : vector<80x256xf32>
    %11 = arith.select %8, %6, %10 : vector<80x256xi1>, vector<80x256xf32>
    %12 = arith.truncf %11 : vector<80x256xf32> to vector<80x256xbf16>
    %c0_8 = arith.constant 0 : index
    %c0_9 = arith.constant 0 : index
    %13 = vector.load %arg5[%c0_8, %c0_9] : memref<80x80xbf16, #tpu.memory_space<vmem>>, vector<80x80xbf16>
    %cst_10 = arith.constant dense<0.000000e+00> : vector<80x256xf32>
    %14 = tpu.matmul %13, %12, %cst_10 {dimension_numbers = #tpu.dot_dimension_numbers<[1], [0], [0], [1], [0, 0, 1, 1], [], []>} : vector<80x80xbf16>, vector<80x256xbf16>, vector<80x256xf32> -> vector<80x256xf32>
    %c0_11 = arith.constant 0 : index
    %c0_12 = arith.constant 0 : index
    %15 = vector.load %arg6[%c0_11, %c0_12] : memref<80x1xf32, #tpu.memory_space<vmem>>, vector<80x1xf32>
    %16 = vector.broadcast %15 : vector<80x1xf32> to vector<80x256xf32>
    %17 = arith.addf %14, %16 : vector<80x256xf32>
    %cst_13 = arith.constant 0.000000e+00 : f32
    %18 = vector.broadcast %cst_13 : f32 to vector<80x256xf32>
    %19 = arith.cmpf oge, %17, %18 : vector<80x256xf32>
    %cst_14 = arith.constant 0.00999999977 : f32
    %20 = vector.broadcast %cst_14 : f32 to vector<80x256xf32>
    %21 = arith.mulf %20, %17 : vector<80x256xf32>
    %22 = arith.select %19, %17, %21 : vector<80x256xi1>, vector<80x256xf32>
    %23 = arith.truncf %22 : vector<80x256xf32> to vector<80x256xbf16>
    %c0_15 = arith.constant 0 : index
    %c0_16 = arith.constant 0 : index
    %24 = vector.load %arg7[%c0_15, %c0_16] : memref<216x80xbf16, #tpu.memory_space<vmem>>, vector<216x80xbf16>
    %cst_17 = arith.constant dense<0.000000e+00> : vector<216x256xf32>
    %25 = tpu.matmul %24, %23, %cst_17 {dimension_numbers = #tpu.dot_dimension_numbers<[1], [0], [0], [1], [0, 0, 1, 1], [], []>} : vector<216x80xbf16>, vector<80x256xbf16>, vector<216x256xf32> -> vector<216x256xf32>
    %c0_18 = arith.constant 0 : index
    %c0_19 = arith.constant 0 : index
    %26 = vector.load %arg8[%c0_18, %c0_19] : memref<216x1xf32, #tpu.memory_space<vmem>>, vector<216x1xf32>
    %27 = vector.broadcast %26 : vector<216x1xf32> to vector<216x256xf32>
    %28 = arith.addf %25, %27 : vector<216x256xf32>
    %c0_20 = arith.constant 0 : index
    %c0_21 = arith.constant 0 : index
    %c0_22 = arith.constant 0 : index
    %29 = vector.load %arg9[%c0_20, %c0_21, %c0_22] : memref<1x216x256xf32, #tpu.memory_space<vmem>>, vector<1x216x256xf32>
    %30 = vector.shape_cast %29 : vector<1x216x256xf32> to vector<216x256xf32>
    %31 = vector.shape_cast %28 : vector<216x256xf32> to vector<1x216x256xf32>
    tpu.vector_store %arg9[%c0_20, %c0_21, %c0_22], %31 {strides = array<i32>} : memref<1x216x256xf32, #tpu.memory_space<vmem>>, vector<1x216x256xf32>,
    return
  }
  func.func @transform_0(%arg0: i32, %arg1: i32) -> (i32, i32, i32) {
    %c0_i32 = arith.constant 0 : i32
    %c0_i32_0 = arith.constant 0 : i32
    return %arg0, %c0_i32, %arg1 : i32, i32, i32
  }
  func.func @transform_1(%arg0: i32, %arg1: i32) -> (i32, i32) {
    %c0_i32 = arith.constant 0 : i32
    %c0_i32_0 = arith.constant 0 : i32
    %c0_i32_1 = arith.constant 0 : i32
    return %c0_i32, %c0_i32_0 : i32, i32
  }
  func.func @transform_2(%arg0: i32, %arg1: i32) -> (i32, i32) {
    %c0_i32 = arith.constant 0 : i32
    %c0_i32_0 = arith.constant 0 : i32
    %c0_i32_1 = arith.constant 0 : i32
    return %c0_i32, %c0_i32_0 : i32, i32
  }
  func.func @transform_3(%arg0: i32, %arg1: i32) -> (i32, i32) {
    %c0_i32 = arith.constant 0 : i32
    %c0_i32_0 = arith.constant 0 : i32
    %c0_i32_1 = arith.constant 0 : i32
    return %c0_i32, %c0_i32_0 : i32, i32
  }
  func.func @transform_4(%arg0: i32, %arg1: i32) -> (i32, i32) {
    %c0_i32 = arith.constant 0 : i32
    %c0_i32_0 = arith.constant 0 : i32
    %c0_i32_1 = arith.constant 0 : i32
    return %c0_i32, %c0_i32_0 : i32, i32
  }
  func.func @transform_5(%arg0: i32, %arg1: i32) -> (i32, i32) {
    %c0_i32 = arith.constant 0 : i32
    %c0_i32_0 = arith.constant 0 : i32
    %c0_i32_1 = arith.constant 0 : i32
    return %c0_i32, %c0_i32_0 : i32, i32
  }
  func.func @transform_6(%arg0: i32, %arg1: i32) -> (i32, i32) {
    %c0_i32 = arith.constant 0 : i32
    %c0_i32_0 = arith.constant 0 : i32
    %c0_i32_1 = arith.constant 0 : i32
    return %c0_i32, %c0_i32_0 : i32, i32
  }
  func.func @transform_7(%arg0: i32, %arg1: i32) -> (i32, i32, i32) {
    %c0_i32 = arith.constant 0 : i32
    %c0_i32_0 = arith.constant 0 : i32
    return %arg0, %c0_i32, %arg1 : i32, i32, i32
  }
}

</mosaic_0001>

<llo_original>
// kernel: tpu_custom_call.1
$region0: #{tpu_custom_call.1}
  #allocation0 [shape = 'u32[]', space=smem, size = 0x4, offset = 0x4, fixed_abs, tag = 'smem constant byte address 0x4 - core index']
  #allocation1 [shape = 'u32[144,128]{1,0:T(1,128)}', space=vmem, size = 0x12000, scoped, tag = 'internal scratch']
  %s0 = inlined_call_operand.vmem [shape: bf16[2,96,256], index: 0, kind: input, shape index: {}]
  %s1 = inlined_call_operand.vmem [shape: bf16[80,96], index: 1, kind: input, shape index: {}]
  %s2 = inlined_call_operand.vmem [shape: f32[80,1], index: 2, kind: input, shape index: {}]
  %s3 = inlined_call_operand.vmem [shape: bf16[80,80], index: 3, kind: input, shape index: {}]
  %s4 = inlined_call_operand.vmem [shape: f32[80,1], index: 4, kind: input, shape index: {}]
  %s5 = inlined_call_operand.vmem [shape: bf16[216,80], index: 5, kind: input, shape index: {}]
  %s6 = inlined_call_operand.vmem [shape: f32[216,1], index: 6, kind: input, shape index: {}]
  %s7 = inlined_call_operand.hbm [shape: f32[2,216,256], index: 7, kind: output, shape index: {}]
  %s8 = sld [smem:[#allocation0]]
  $region61: #{tpu_custom_call.1} parent=0
    _
  %s10 = ssub.s32 1, %s8
  %s11 = scalar_select 0, %s10, %s8
  $region1: #{tpu_custom_call.1} parent=0
    #allocation2 [shape = 'u8[442368]{0}', space=vmem, size = 0x6c000, scoped, tag = 'output window, operand 0']
    #allocation3 [shape = 's32[2]{0}', space=sflag, size = 0x8, scoped, tag = 'scoped memory for tpu_custom_call.1']
    %12 = vsyncpa [#allocation3], 0
    %s13 = scalar_lea.sflag [#allocation3], 1
    %14 = vsyncpa %s13, 0
    loop: start=0, step=1, limit=4
    $region2: #{tpu_custom_call.1} parent=1 // loop_pre_header
      _
    $region3: #{tpu_custom_call.1} parent=1 // loop_header
      %s16 = sphi 0, %s20
      %p17 = scmp.ge.s32.totalorder %s16, 4
      %s23 = sphi 0, %s35
      %s24 = sphi 0, %s31
      %s25 = sphi 0, %s23
      %s26 = sphi 0, %s24
      %s27 = sphi 0, %s25
      %s28 = sphi 0, %s26
      %s40 = sphi 0, %s42
      %s43 = sphi 0, %s40
      %s44 = sphi 0, %s43
      %s60 = sphi 0, %s44
      %s64 = sphi 0, %s64
      %s66 = sphi 0, %s64
      %s67 = sphi 0, %s66
      %s81 = sphi 0, %s67
      %s85 = sphi 0, %s85
      %s87 = sphi 0, %s85
      %s88 = sphi 0, %s87
      %s102 = sphi 0, %s88
      %s106 = sphi 0, %s106
      %s108 = sphi 0, %s106
      %s109 = sphi 0, %s108
      %s123 = sphi 0, %s109
      %s127 = sphi 0, %s127
      %s129 = sphi 0, %s127
      %s130 = sphi 0, %s129
      %s144 = sphi 0, %s130
      %s148 = sphi 0, %s148
      %s150 = sphi 0, %s148
      %s151 = sphi 0, %s150
      %s165 = sphi 0, %s151
      %s169 = sphi 0, %s169
      %s171 = sphi 0, %s169
      %s172 = sphi 0, %s171
      %s186 = sphi 0, %s172
      %s194 = sphi 0, %s196
      %s197 = sphi 0, %s194
      %s198 = sphi 0, %s197
      %s214 = sphi 0, %s198
    $region4: #{tpu_custom_call.1} parent=1 // loop_header_branch
      %19 = sbr.rel (%p17) target = $region8
    $region5: #{tpu_custom_call.1} parent=1 // loop_body
      %s21 = ssub.s32 %s16, 1
      %s22 = ssub.s32 %s16, 2
      %s29 = sadd.s32 1, %s24
      %p30 = scmp.ge.s32.totalorder %s29, 1
      %s31 = scalar_select %p30, 0, %s29
      %s32 = sadd.s32 1, %s23
      %s33 = scalar_select %p30, %s32, %s23
      %p34 = scmp.ge.s32.totalorder %s33, 2
      %s35 = scalar_select %p34, 0, %s33
      %s36 = ssub.s32 %s23, %s35
      %s37 = ssub.s32 %s24, %s31
      %s38 = sor.u32 %s36, %s37
      %p39 = scmp.eq.s32.totalorder %s38, 0
      %s41 = sadd.s32 %s40, 1
      %s42 = scalar_select %p39, %s40, %s41
      %p45 = pneg %p39
      %p46 = scmp.eq.s32.totalorder %s16, 1
      %p47 = por %p45, %p46
      %p48 = scmp.ne.s32.totalorder %s40, %s43
      %p49 = scmp.eq.s32.totalorder %s16, 0
      %p50 = por %p48, %p49
      %p51 = scmp.ne.s32.totalorder %s40, %s43
      %p52 = scmp.eq.s32.totalorder %s21, 1
      %p53 = por %p51, %p52
      %p54 = scmp.ne.s32.totalorder %s43, %s44
      %p55 = scmp.eq.s32.totalorder %s21, 0
      %p56 = por %p54, %p55
      %p57 = scmp.ne.s32.totalorder %s43, %s44
      %p58 = scmp.eq.s32.totalorder %s22, 1
      %p59 = por %p57, %p58
      %p61 = scmp.ne.s32.totalorder %s44, %s60
      %p62 = scmp.eq.s32.totalorder %s22, 0
      %p63 = por %p61, %p62
      %s65 = sadd.s32 %s64, 1
      %p68 = scmp.eq.s32.totalorder %s16, 1
      %p69 = scmp.ne.s32.totalorder %s64, %s66
      %p70 = scmp.eq.s32.totalorder %s16, 0
      %p71 = por %p69, %p70
      %p72 = scmp.ne.s32.totalorder %s64, %s66
      %p73 = scmp.eq.s32.totalorder %s21, 1
      %p74 = por %p72, %p73
      %p75 = scmp.ne.s32.totalorder %s66, %s67
      %p76 = scmp.eq.s32.totalorder %s21, 0
      %p77 = por %p75, %p76
      %p78 = scmp.ne.s32.totalorder %s66, %s67
      %p79 = scmp.eq.s32.totalorder %s22, 1
      %p80 = por %p78, %p79
      %p82 = scmp.ne.s32.totalorder %s67, %s81
      %p83 = scmp.eq.s32.totalorder %s22, 0
      %p84 = por %p82, %p83
      %s86 = sadd.s32 %s85, 1
      %p89 = scmp.eq.s32.totalorder %s16, 1
      %p90 = scmp.ne.s32.totalorder %s85, %s87
      %p91 = scmp.eq.s32.totalorder %s16, 0
      %p92 = por %p90, %p91
      %p93 = scmp.ne.s32.totalorder %s85, %s87
      %p94 = scmp.eq.s32.totalorder %s21, 1
      %p95 = por %p93, %p94
      %p96 = scmp.ne.s32.totalorder %s87, %s88
      %p97 = scmp.eq.s32.totalorder %s21, 0
      %p98 = por %p96, %p97
      %p99 = scmp.ne.s32.totalorder %s87, %s88
      %p100 = scmp.eq.s32.totalorder %s22, 1
      %p101 = por %p99, %p100
      %p103 = scmp.ne.s32.totalorder %s88, %s102
      %p104 = scmp.eq.s32.totalorder %s22, 0
      %p105 = por %p103, %p104
      %s107 = sadd.s32 %s106, 1
      %p110 = scmp.eq.s32.totalorder %s16, 1
      %p111 = scmp.ne.s32.totalorder %s106, %s108
      %p112 = scmp.eq.s32.totalorder %s16, 0
      %p113 = por %p111, %p112
      %p114 = scmp.ne.s32.totalorder %s106, %s108
      %p115 = scmp.eq.s32.totalorder %s21, 1
      %p116 = por %p114, %p115
      %p117 = scmp.ne.s32.totalorder %s108, %s109
      %p118 = scmp.eq.s32.totalorder %s21, 0
      %p119 = por %p117, %p118
      %p120 = scmp.ne.s32.totalorder %s108, %s109
      %p121 = scmp.eq.s32.totalorder %s22, 1
      %p122 = por %p120, %p121
      %p124 = scmp.ne.s32.totalorder %s109, %s123
      %p125 = scmp.eq.s32.totalorder %s22, 0
      %p126 = por %p124, %p125
      %s128 = sadd.s32 %s127, 1
      %p131 = scmp.eq.s32.totalorder %s16, 1
      %p132 = scmp.ne.s32.totalorder %s127, %s129
      %p133 = scmp.eq.s32.totalorder %s16, 0
      %p134 = por %p132, %p133
      %p135 = scmp.ne.s32.totalorder %s127, %s129
      %p136 = scmp.eq.s32.totalorder %s21, 1
      %p137 = por %p135, %p136
      %p138 = scmp.ne.s32.totalorder %s129, %s130
      %p139 = scmp.eq.s32.totalorder %s21, 0
      %p140 = por %p138, %p139
      %p141 = scmp.ne.s32.totalorder %s129, %s130
      %p142 = scmp.eq.s32.totalorder %s22, 1
      %p143 = por %p141, %p142
      %p145 = scmp.ne.s32.totalorder %s130, %s144
      %p146 = scmp.eq.s32.totalorder %s22, 0
      %p147 = por %p145, %p146
      %s149 = sadd.s32 %s148, 1
      %p152 = scmp.eq.s32.totalorder %s16, 1
      %p153 = scmp.ne.s32.totalorder %s148, %s150
      %p154 = scmp.eq.s32.totalorder %s16, 0
      %p155 = por %p153, %p154
      %p156 = scmp.ne.s32.totalorder %s148, %s150
      %p157 = scmp.eq.s32.totalorder %s21, 1
      %p158 = por %p156, %p157
      %p159 = scmp.ne.s32.totalorder %s150, %s151
      %p160 = scmp.eq.s32.totalorder %s21, 0
      %p161 = por %p159, %p160
      %p162 = scmp.ne.s32.totalorder %s150, %s151
      %p163 = scmp.eq.s32.totalorder %s22, 1
      %p164 = por %p162, %p163
      %p166 = scmp.ne.s32.totalorder %s151, %s165
      %p167 = scmp.eq.s32.totalorder %s22, 0
      %p168 = por %p166, %p167
      %s170 = sadd.s32 %s169, 1
      %p173 = scmp.eq.s32.totalorder %s16, 1
      %p174 = scmp.ne.s32.totalorder %s169, %s171
      %p175 = scmp.eq.s32.totalorder %s16, 0
      %p176 = por %p174, %p175
      %p177 = scmp.ne.s32.totalorder %s169, %s171
      %p178 = scmp.eq.s32.totalorder %s21, 1
      %p179 = por %p177, %p178
      %p180 = scmp.ne.s32.totalorder %s171, %s172
      %p181 = scmp.eq.s32.totalorder %s21, 0
      %p182 = por %p180, %p181
      %p183 = scmp.ne.s32.totalorder %s171, %s172
      %p184 = scmp.eq.s32.totalorder %s22, 1
      %p185 = por %p183, %p184
      %p187 = scmp.ne.s32.totalorder %s172, %s186
      %p188 = scmp.eq.s32.totalorder %s22, 0
      %p189 = por %p187, %p188
      %s190 = ssub.s32 %s23, %s35
      %s191 = ssub.s32 %s24, %s31
      %s192 = sor.u32 %s190, %s191
      %p193 = scmp.eq.s32.totalorder %s192, 0
      %s195 = sadd.s32 %s194, 1
      %s196 = scalar_select %p193, %s194, %s195
      %p199 = pneg %p193
      %p200 = scmp.eq.s32.totalorder %s16, 1
      %p201 = por %p199, %p200
      %p202 = scmp.ne.s32.totalorder %s194, %s197
      %p203 = scmp.eq.s32.totalorder %s16, 0
      %p204 = por %p202, %p203
      %p205 = scmp.ne.s32.totalorder %s194, %s197
      %p206 = scmp.eq.s32.totalorder %s21, 1
      %p207 = por %p205, %p206
      %p208 = scmp.ne.s32.totalorder %s197, %s198
      %p209 = scmp.eq.s32.totalorder %s21, 0
      %p210 = por %p208, %p209
      %p211 = scmp.ne.s32.totalorder %s197, %s198
      %p212 = scmp.eq.s32.totalorder %s22, 1
      %p213 = por %p211, %p212
      %p215 = scmp.ne.s32.totalorder %s198, %s214
      %p216 = scmp.eq.s32.totalorder %s22, 0
      %p217 = por %p215, %p216
      %p218 = scmp.le.s32.totalorder 1, %s16
      %p219 = scmp.lt.s32.totalorder %s16, 3
      %p220 = pnand %p218, %p219
      %p221 = pneg %p220
      // Predicated region
      $region9: #{tpu_custom_call.1} parent=5 // pred_check
        _
      $region10: #{tpu_custom_call.1} parent=5 // pred_check_branch
        %223 = sbr.rel (%p220) target = $region12
      $region11: #{tpu_custom_call.1} parent=5 // pred_region
        %s224 = ssub.s32 %s16, 1
        // Predicated region
        $region13: #{tpu_custom_call.1} parent=11 // pred_check
          %p225 = pneg %p77
        $region14: #{tpu_custom_call.1} parent=11 // pred_check_branch
          %227 = sbr.rel (%p225) target = $region16
        $region15: #{tpu_custom_call.1} parent=11 // pred_region
          _
        $region16: #{tpu_custom_call.1} parent=11 // pred_fallthru
          _
        // Predicated region
        $region17: #{tpu_custom_call.1} parent=11 // pred_check
          %p228 = pneg %p98
        $region18: #{tpu_custom_call.1} parent=11 // pred_check_branch
          %230 = sbr.rel (%p228) target = $region20
        $region19: #{tpu_custom_call.1} parent=11 // pred_region
          _
        $region20: #{tpu_custom_call.1} parent=11 // pred_fallthru
          _
        // Predicated region
        $region21: #{tpu_custom_call.1} parent=11 // pred_check
          %p231 = pneg %p119
        $region22: #{tpu_custom_call.1} parent=11 // pred_check_branch
          %233 = sbr.rel (%p231) target = $region24
        $region23: #{tpu_custom_call.1} parent=11 // pred_region
          _
        $region24: #{tpu_custom_call.1} parent=11 // pred_fallthru
          _
        // Predicated region
        $region25: #{tpu_custom_call.1} parent=11 // pred_check
          %p234 = pneg %p140
        $region26: #{tpu_custom_call.1} parent=11 // pred_check_branch
          %236 = sbr.rel (%p234) target = $region28
        $region27: #{tpu_custom_call.1} parent=11 // pred_region
          _
        $region28: #{tpu_custom_call.1} parent=11 // pred_fallthru
          _
        // Predicated region
        $region29: #{tpu_custom_call.1} parent=11 // pred_check
          %p237 = pneg %p161
        $region30: #{tpu_custom_call.1} parent=11 // pred_check_branch
          %239 = sbr.rel (%p237) target = $region32
        $region31: #{tpu_custom_call.1} parent=11 // pred_region
          _
        $region32: #{tpu_custom_call.1} parent=11 // pred_fallthru
          _
        // Predicated region
        $region33: #{tpu_custom_call.1} parent=11 // pred_check
          %p240 = pneg %p182
        $region34: #{tpu_custom_call.1} parent=11 // pred_check_branch
          %242 = sbr.rel (%p240) target = $region36
        $region35: #{tpu_custom_call.1} parent=11 // pred_region
          _
        $region36: #{tpu_custom_call.1} parent=11 // pred_fallthru
          _
      $region12: #{tpu_custom_call.1} parent=5 // pred_fallthru
        _
      %p243 = scmp.lt.s32.totalorder %s16, 2
      // Predicated region
      $region37: #{tpu_custom_call.1} parent=5 // pred_check
        %p244 = pneg %p243
      $region38: #{tpu_custom_call.1} parent=5 // pred_check_branch
        %246 = sbr.rel (%p244) target = $region40
      $region39: #{tpu_custom_call.1} parent=5 // pred_region
        // Predicated region
        $region41: #{tpu_custom_call.1} parent=39 // pred_check
          %p247 = pneg %p50
        $region42: #{tpu_custom_call.1} parent=39 // pred_check_branch
          %249 = sbr.rel (%p247) target = $region44
        $region43: #{tpu_custom_call.1} parent=39 // pred_region
          %s250 = smul.u32 2, %s24
          %p251 = scmp.lt.s32.totalorder %s23, 1
          %s252 = scalar_select %p251, %s23, 1
          %p253 = scmp.lt.s32.totalorder %s250, 1
          %s254 = scalar_select %p253, %s250, 1
          %s255 = smul.addr %s252, 24
          %s256 = sadd.s32 %s254, %s255
          %s257 = smul.addr %s256, 4
          %s258 = scalar_lea.vmem %s0, %s257
          %s259 = smul.u32 2, %s24
        $region44: #{tpu_custom_call.1} parent=39 // pred_fallthru
          _
      $region40: #{tpu_custom_call.1} parent=5 // pred_fallthru
        _
      %p260 = scmp.le.s32.totalorder 1, %s16
      %p261 = scmp.lt.s32.totalorder %s16, 3
      %p262 = pnand %p260, %p261
      %p263 = pneg %p262
      // Predicated region
      $region45: #{tpu_custom_call.1} parent=5 // pred_check
        _
      $region46: #{tpu_custom_call.1} parent=5 // pred_check_branch
        %265 = sbr.rel (%p262) target = $region48
      $region47: #{tpu_custom_call.1} parent=5 // pred_region
        %s266 = ssub.s32 %s16, 1
        %s267 = smul.u32 2, %s26
        %p268 = scmp.lt.s32.totalorder %s25, 1
        %s269 = scalar_select %p268, %s25, 1
        %p270 = scmp.lt.s32.totalorder %s267, 1
        %s271 = scalar_select %p270, %s267, 1
        %s272 = smul.addr %s269, 24
        %s273 = sadd.s32 %s271, %s272
        %s274 = smul.addr %s273, 4
        %s275 = scalar_lea.vmem %s0, %s274
        %p276 = pneg %p56
        %p277 = pneg %p53
        %p278 = pneg %p77
        %p279 = pneg %p74
        %p280 = pneg %p98
        %p281 = pneg %p95
        %p282 = pneg %p119
        %p283 = pneg %p116
        %p284 = pneg %p140
        %p285 = pneg %p137
        %p286 = pneg %p161
        %p287 = pneg %p158
        %p288 = pneg %p182
        %p289 = pneg %p179
        %p290 = pneg %p210
        %p291 = pneg %p207
        %s292 = sand.u32 %s197, 1
        %s293 = scalar_lea.sflag [#allocation3], %s292
        %s294 = sand.u32 %s197, 1
        %s295 = smul.addr %s294, 432
        %s296 = scalar_lea.vmem [#allocation2], %s295
        %s297 = smul.u32 2, %s26
        %p298 = scmp.lt.s32.totalorder %s25, 1
        %s299 = scalar_select %p298, %s25, 1
        %p300 = scmp.lt.s32.totalorder %s297, 1
        %s301 = scalar_select %p300, %s297, 1
        %s302 = smul.addr %s299, 24
        %s303 = sadd.s32 %s301, %s302
        %s304 = smul.addr %s303, 4
        %s305 = scalar_lea.vmem %s0, %s304
        %s306 = smul.u32 2, %s26
        %s307 = smul.u32 2, %s26
        %v309 = vld [vmem:[%s305] sm:$0xff]
        %v310 = vld [vmem:[%s305 + $0x8] sm:$0xff]
        %v311 = vld [vmem:[%s305 + $0x10] sm:$0xff]
        %v312 = vld [vmem:[%s305 + $0x18] sm:$0xff]
        %v313 = vld [vmem:[%s305 + $0x20] sm:$0xff]
        %v314 = vld [vmem:[%s305 + $0x28] sm:$0xff]
        %v315 = vld [vmem:[%s305 + $0x30] sm:$0xff]
        %v316 = vld [vmem:[%s305 + $0x38] sm:$0xff]
        %v317 = vld [vmem:[%s305 + $0x40] sm:$0xff]
        %v318 = vld [vmem:[%s305 + $0x48] sm:$0xff]
        %v319 = vld [vmem:[%s305 + $0x50] sm:$0xff]
        %v320 = vld [vmem:[%s305 + $0x58] sm:$0xff]
        %v321 = vld [vmem:[%s1] sm:$0xf]
        %v322 = vld [vmem:[%s1 + $0x4] sm:$0xf]
        %v323 = vld [vmem:[%s1 + $0x8] sm:$0xf]
        %v324 = vld [vmem:[%s1 + $0xc] sm:$0xf]
        %v325 = vld [vmem:[%s1 + $0x10] sm:$0xf]
        %v326 = vld [vmem:[%s1 + $0x14] sm:$0xf]
        %v327 = vld [vmem:[%s1 + $0x18] sm:$0xf]
        %v328 = vld [vmem:[%s1 + $0x1c] sm:$0xf]
        %v329 = vld [vmem:[%s1 + $0x20] sm:$0xf]
        %v330 = vld [vmem:[%s1 + $0x24] sm:$0xf]
        %v331 = vld [vmem:[%s2] sm:$0xff]
        %v332 = vld [vmem:[%s2 + $0x8] sm:$0xff]
        %v333 = vld [vmem:[%s2 + $0x10] sm:$0xff]
        %v334 = vld [vmem:[%s2 + $0x18] sm:$0xff]
        %v335 = vld [vmem:[%s2 + $0x20] sm:$0xff]
        %v336 = vld [vmem:[%s2 + $0x28] sm:$0xff]
        %v337 = vld [vmem:[%s2 + $0x30] sm:$0xff]
        %v338 = vld [vmem:[%s2 + $0x38] sm:$0xff]
        %v339 = vld [vmem:[%s2 + $0x40] sm:$0xff]
        %v340 = vld [vmem:[%s2 + $0x48] sm:$0xff]
        %342 = vset.pattern.permute.xlu0 0
        %343 = vperm.xlu0 %342, %v331
        %v344 = vpop.permute.xlu0 %343
        %347 = vset.pattern.permute.xlu0 0
        %348 = vperm.xlu0 %347, %v332
        %v349 = vpop.permute.xlu0 %348
        %352 = vset.pattern.permute.xlu0 0
        %353 = vperm.xlu0 %352, %v333
        %v354 = vpop.permute.xlu0 %353
        %357 = vset.pattern.permute.xlu0 0
        %358 = vperm.xlu0 %357, %v334
        %v359 = vpop.permute.xlu0 %358
        %362 = vset.pattern.permute.xlu0 0
        %363 = vperm.xlu0 %362, %v335
        %v364 = vpop.permute.xlu0 %363
        %367 = vset.pattern.permute.xlu0 0
        %368 = vperm.xlu0 %367, %v336
        %v369 = vpop.permute.xlu0 %368
        %372 = vset.pattern.permute.xlu0 0
        %373 = vperm.xlu0 %372, %v337
        %v374 = vpop.permute.xlu0 %373
        %377 = vset.pattern.permute.xlu0 0
        %378 = vperm.xlu0 %377, %v338
        %v379 = vpop.permute.xlu0 %378
        %382 = vset.pattern.permute.xlu0 0
        %383 = vperm.xlu0 %382, %v339
        %v384 = vpop.permute.xlu0 %383
        %387 = vset.pattern.permute.xlu0 0
        %388 = vperm.xlu0 %387, %v340
        %v389 = vpop.permute.xlu0 %388
        %v401 = vunpack.c.l.b16 %v321
        %v402 = vunpack.c.l.b16 %v322
        %v403 = vunpack.c.l.b16 %v323
        %v404 = vunpack.c.l.b16 %v324
        %v405 = vunpack.c.l.b16 %v325
        %v406 = vunpack.c.l.b16 %v326
        %v407 = vunpack.c.l.b16 %v327
        %v408 = vunpack.c.l.b16 %v328
        %v409 = vunpack.c.l.b16 %v329
        %v410 = vunpack.c.l.b16 %v330
        %v411 = vpack.c.b16 %v402, %v401
        %v412 = vpack.c.b16 %v404, %v403
        %v413 = vpack.c.b16 %v406, %v405
        %v414 = vpack.c.b16 %v408, %v407
        %v415 = vpack.c.b16 %v410, %v409
        %v428 = vunpack.c.l.b16 %v309
        %v429 = vunpack.c.h.b16 %v309
        %v430 = vunpack.c.l.b16 %v310
        %v431 = vunpack.c.h.b16 %v310
        %v432 = vunpack.c.l.b16 %v311
        %v433 = vunpack.c.h.b16 %v311
        %v434 = vunpack.c.l.b16 %v312
        %v435 = vunpack.c.h.b16 %v312
        %v436 = vunpack.c.l.b16 %v313
        %v437 = vunpack.c.h.b16 %v313
        %v438 = vunpack.c.l.b16 %v314
        %v439 = vunpack.c.h.b16 %v314
        %v440 = vunpack.c.l.b16 %v315
        %v441 = vunpack.c.h.b16 %v315
        %v442 = vunpack.c.l.b16 %v316
        %v443 = vunpack.c.h.b16 %v316
        %v444 = vunpack.c.l.b16 %v317
        %v445 = vunpack.c.h.b16 %v317
        %v446 = vunpack.c.l.b16 %v318
        %v447 = vunpack.c.h.b16 %v318
        %v448 = vunpack.c.l.b16 %v319
        %v449 = vunpack.c.h.b16 %v319
        %v450 = vunpack.c.l.b16 %v320
        %v451 = vunpack.c.h.b16 %v320
        %v452 = vpack.c.b16 %v430, %v428
        %v453 = vpack.c.b16 %v431, %v429
        %v454 = vpack.c.b16 %v434, %v432
        %v455 = vpack.c.b16 %v435, %v433
        %v456 = vpack.c.b16 %v438, %v436
        %v457 = vpack.c.b16 %v439, %v437
        %v458 = vpack.c.b16 %v442, %v440
        %v459 = vpack.c.b16 %v443, %v441
        %v460 = vpack.c.b16 %v446, %v444
        %v461 = vpack.c.b16 %v447, %v445
        %v462 = vpack.c.b16 %v450, %v448
        %v463 = vpack.c.b16 %v451, %v449
        %vm476 = vcmask 785408
        %v478 = vsel %vm476, %v411, 0
        %v481 = vsel %vm476, %v412, 0
        %v484 = vsel %vm476, %v413, 0
        %v487 = vsel %vm476, %v414, 0
        %v490 = vsel %vm476, %v415, 0
        %492 = vmatprep.subr.bf16.mxu0 %v453
        %493 = vmatpush1.bf16.msra.mxu0 %v452
        %494 = vmatprep.subr.bf16.mxu0 %v455
        %495 = vmatpush1.bf16.msra.mxu0 %v454
        %496 = vmatprep.subr.bf16.mxu0 %v457
        %497 = vmatpush1.bf16.msra.mxu0 %v456
        %498 = vmatprep.subr.bf16.mxu0 %v459
        %499 = vmatpush1.bf16.msra.mxu0 %v458
        %500 = vmatprep.subr.bf16.mxu0 %v461
        %501 = vmatpush1.bf16.msra.mxu0 %v460
        %502 = vmatprep.subr.bf16.mxu0 %v463
        %503 = vmatpush1.bf16.msra.mxu0 %v462
        %504 = vmatprep.subr.bf16.mxu0 0
        %505 = vmatpush1.bf16.msra.mxu0 0
        %506 = vmatprep.subr.bf16.mxu0 0
        %507 = vmatpush1.bf16.msra.mxu0 0
        %508 = vmatprep.subr.bf16.mxu0 0
        %509 = vmatpush1.bf16.msra.mxu0 0
        %510 = vmatprep.subr.bf16.mxu0 0
        %511 = vmatpush1.bf16.msra.mxu0 0
        %512 = vmatprep.subr.bf16.mxu0 0
        %513 = vmatpush1.bf16.msra.mxu0 0
        %514 = vmatprep.subr.bf16.mxu0 0
        %515 = vmatpush1.bf16.msra.mxu0 0
        %516 = vmatprep.subr.bf16.mxu0 0
        %517 = vmatpush1.bf16.msra.mxu0 0
        %518 = vmatprep.subr.bf16.mxu0 0
        %519 = vmatpush1.bf16.msra.mxu0 0
        %520 = vmatprep.subr.bf16.mxu0 0
        %521 = vmatpush1.bf16.msra.mxu0 0
        %522 = vmatprep.subr.bf16.mxu0 0
        %523 = vmatpush1.bf16.msra.mxu0 0
        %524 = vmatprep.mubr.bf16.mxu0 0
        %525 = vmatmul.mubr.bf16.gmra.mrb[0].mxu0 %v478
        %v526 = vpop.f32.mrb[0].mxu0
        %v527 = vadd.f32 %v344, %v526
        %v528 = vpop.f32.mrb[0].mxu0
        %v529 = vadd.f32 %v344, %v528
        %v530 = vpop.f32.mrb[0].mxu0
        %v531 = vadd.f32 %v349, %v530
        %v532 = vpop.f32.mrb[0].mxu0
        %v533 = vadd.f32 %v349, %v532
        %534 = vmatprep.mubr.bf16.mxu0 0
        %535 = vmatmul.mubr.bf16.gmra.mrb[0].mxu0 %v481
        %v536 = vpop.f32.mrb[0].mxu0
        %v537 = vadd.f32 %v354, %v536
        %v538 = vpop.f32.mrb[0].mxu0
        %v539 = vadd.f32 %v354, %v538
        %v540 = vpop.f32.mrb[0].mxu0
        %v541 = vadd.f32 %v359, %v540
        %v542 = vpop.f32.mrb[0].mxu0
        %v543 = vadd.f32 %v359, %v542
        %544 = vmatprep.mubr.bf16.mxu0 0
        %545 = vmatmul.mubr.bf16.gmra.mrb[0].mxu0 %v484
        %v546 = vpop.f32.mrb[0].mxu0
        %v547 = vadd.f32 %v364, %v546
        %v548 = vpop.f32.mrb[0].mxu0
        %v549 = vadd.f32 %v364, %v548
        %v550 = vpop.f32.mrb[0].mxu0
        %v551 = vadd.f32 %v369, %v550
        %v552 = vpop.f32.mrb[0].mxu0
        %v553 = vadd.f32 %v369, %v552
        %554 = vmatprep.mubr.bf16.mxu0 0
        %555 = vmatmul.mubr.bf16.gmra.mrb[0].mxu0 %v487
        %v556 = vpop.f32.mrb[0].mxu0
        %v557 = vadd.f32 %v374, %v556
        %v558 = vpop.f32.mrb[0].mxu0
        %v559 = vadd.f32 %v374, %v558
        %v560 = vpop.f32.mrb[0].mxu0
        %v561 = vadd.f32 %v379, %v560
        %v562 = vpop.f32.mrb[0].mxu0
        %v563 = vadd.f32 %v379, %v562
        %564 = vmatprep.mubr.bf16.mxu0 0
        %565 = vmatmul.mubr.bf16.gmra.mrb[0].mxu0 %v490
        %v566 = vpop.f32.mrb[0].mxu0
        %v567 = vadd.f32 %v384, %v566
        %v568 = vpop.f32.mrb[0].mxu0
        %v569 = vadd.f32 %v384, %v568
        %v570 = vpop.f32.mrb[0].mxu0
        %v571 = vadd.f32 %v389, %v570
        %v572 = vpop.f32.mrb[0].mxu0
        %v573 = vadd.f32 %v389, %v572
        %574 = vdwg.mxu0
        %vm575 = vcmp.ge.f32.partialorder %v527, 0.0
        %vm576 = vcmp.ge.f32.partialorder %v529, 0.0
        %vm577 = vcmp.ge.f32.partialorder %v531, 0.0
        %vm578 = vcmp.ge.f32.partialorder %v533, 0.0
        %vm579 = vcmp.ge.f32.partialorder %v537, 0.0
        %vm580 = vcmp.ge.f32.partialorder %v539, 0.0
        %vm581 = vcmp.ge.f32.partialorder %v541, 0.0
        %vm582 = vcmp.ge.f32.partialorder %v543, 0.0
        %vm583 = vcmp.ge.f32.partialorder %v547, 0.0
        %vm584 = vcmp.ge.f32.partialorder %v549, 0.0
        %vm585 = vcmp.ge.f32.partialorder %v551, 0.0
        %vm586 = vcmp.ge.f32.partialorder %v553, 0.0
        %vm587 = vcmp.ge.f32.partialorder %v557, 0.0
        %vm588 = vcmp.ge.f32.partialorder %v559, 0.0
        %vm589 = vcmp.ge.f32.partialorder %v561, 0.0
        %vm590 = vcmp.ge.f32.partialorder %v563, 0.0
        %vm591 = vcmp.ge.f32.partialorder %v567, 0.0
        %vm592 = vcmp.ge.f32.partialorder %v569, 0.0
        %vm593 = vcmp.ge.f32.partialorder %v571, 0.0
        %vm594 = vcmp.ge.f32.partialorder %v573, 0.0
        %v595 = vmul.f32 %v527, 0.01
        %v596 = vmul.f32 %v529, 0.01
        %v597 = vmul.f32 %v531, 0.01
        %v598 = vmul.f32 %v533, 0.01
        %v599 = vmul.f32 %v537, 0.01
        %v600 = vmul.f32 %v539, 0.01
        %v601 = vmul.f32 %v541, 0.01
        %v602 = vmul.f32 %v543, 0.01
        %v603 = vmul.f32 %v547, 0.01
        %v604 = vmul.f32 %v549, 0.01
        %v605 = vmul.f32 %v551, 0.01
        %v606 = vmul.f32 %v553, 0.01
        %v607 = vmul.f32 %v557, 0.01
        %v608 = vmul.f32 %v559, 0.01
        %v609 = vmul.f32 %v561, 0.01
        %v610 = vmul.f32 %v563, 0.01
        %v611 = vmul.f32 %v567, 0.01
        %v612 = vmul.f32 %v569, 0.01
        %v613 = vmul.f32 %v571, 0.01
        %v614 = vmul.f32 %v573, 0.01
        %v615 = vsel %vm575, %v527, %v595
        %v616 = vsel %vm576, %v529, %v596
        %v617 = vsel %vm577, %v531, %v597
        %v618 = vsel %vm578, %v533, %v598
        %v619 = vsel %vm579, %v537, %v599
        %v620 = vsel %vm580, %v539, %v600
        %v621 = vsel %vm581, %v541, %v601
        %v622 = vsel %vm582, %v543, %v602
        %v623 = vsel %vm583, %v547, %v603
        %v624 = vsel %vm584, %v549, %v604
        %v625 = vsel %vm585, %v551, %v605
        %v626 = vsel %vm586, %v553, %v606
        %v627 = vsel %vm587, %v557, %v607
        %v628 = vsel %vm588, %v559, %v608
        %v629 = vsel %vm589, %v561, %v609
        %v630 = vsel %vm590, %v563, %v610
        %v631 = vsel %vm591, %v567, %v611
        %v632 = vsel %vm592, %v569, %v612
        %v633 = vsel %vm593, %v571, %v613
        %v634 = vsel %vm594, %v573, %v614
        %v635 = vpack.c.bf16 %v617, %v615
        %v636 = vpack.c.bf16 %v618, %v616
        %v637 = vpack.c.bf16 %v621, %v619
        %v638 = vpack.c.bf16 %v622, %v620
        %v639 = vpack.c.bf16 %v625, %v623
        %v640 = vpack.c.bf16 %v626, %v624
        %v641 = vpack.c.bf16 %v629, %v627
        %v642 = vpack.c.bf16 %v630, %v628
        %v643 = vpack.c.bf16 %v633, %v631
        %v644 = vpack.c.bf16 %v634, %v632
        %v645 = vld [vmem:[%s3] sm:$0xf]
        %v646 = vld [vmem:[%s3 + $0x4] sm:$0xf]
        %v647 = vld [vmem:[%s3 + $0x8] sm:$0xf]
        %v648 = vld [vmem:[%s3 + $0xc] sm:$0xf]
        %v649 = vld [vmem:[%s3 + $0x10] sm:$0xf]
        %v650 = vld [vmem:[%s3 + $0x14] sm:$0xf]
        %v651 = vld [vmem:[%s3 + $0x18] sm:$0xf]
        %v652 = vld [vmem:[%s3 + $0x1c] sm:$0xf]
        %v653 = vld [vmem:[%s3 + $0x20] sm:$0xf]
        %v654 = vld [vmem:[%s3 + $0x24] sm:$0xf]
        %v655 = vld [vmem:[%s4] sm:$0xff]
        %v656 = vld [vmem:[%s4 + $0x8] sm:$0xff]
        %v657 = vld [vmem:[%s4 + $0x10] sm:$0xff]
        %v658 = vld [vmem:[%s4 + $0x18] sm:$0xff]
        %v659 = vld [vmem:[%s4 + $0x20] sm:$0xff]
        %v660 = vld [vmem:[%s4 + $0x28] sm:$0xff]
        %v661 = vld [vmem:[%s4 + $0x30] sm:$0xff]
        %v662 = vld [vmem:[%s4 + $0x38] sm:$0xff]
        %v663 = vld [vmem:[%s4 + $0x40] sm:$0xff]
        %v664 = vld [vmem:[%s4 + $0x48] sm:$0xff]
        %666 = vset.pattern.permute.xlu0 0
        %667 = vperm.xlu0 %666, %v655
        %v668 = vpop.permute.xlu0 %667
        %671 = vset.pattern.permute.xlu0 0
        %672 = vperm.xlu0 %671, %v656
        %v673 = vpop.permute.xlu0 %672
        %676 = vset.pattern.permute.xlu0 0
        %677 = vperm.xlu0 %676, %v657
        %v678 = vpop.permute.xlu0 %677
        %681 = vset.pattern.permute.xlu0 0
        %682 = vperm.xlu0 %681, %v658
        %v683 = vpop.permute.xlu0 %682
        %686 = vset.pattern.permute.xlu0 0
        %687 = vperm.xlu0 %686, %v659
        %v688 = vpop.permute.xlu0 %687
        %691 = vset.pattern.permute.xlu0 0
        %692 = vperm.xlu0 %691, %v660
        %v693 = vpop.permute.xlu0 %692
        %696 = vset.pattern.permute.xlu0 0
        %697 = vperm.xlu0 %696, %v661
        %v698 = vpop.permute.xlu0 %697
        %701 = vset.pattern.permute.xlu0 0
        %702 = vperm.xlu0 %701, %v662
        %v703 = vpop.permute.xlu0 %702
        %706 = vset.pattern.permute.xlu0 0
        %707 = vperm.xlu0 %706, %v663
        %v708 = vpop.permute.xlu0 %707
        %711 = vset.pattern.permute.xlu0 0
        %712 = vperm.xlu0 %711, %v664
        %v713 = vpop.permute.xlu0 %712
        %v725 = vunpack.c.l.b16 %v645
        %v726 = vunpack.c.l.b16 %v646
        %v727 = vunpack.c.l.b16 %v647
        %v728 = vunpack.c.l.b16 %v648
        %v729 = vunpack.c.l.b16 %v649
        %v730 = vunpack.c.l.b16 %v650
        %v731 = vunpack.c.l.b16 %v651
        %v732 = vunpack.c.l.b16 %v652
        %v733 = vunpack.c.l.b16 %v653
        %v734 = vunpack.c.l.b16 %v654
        %v735 = vpack.c.b16 %v726, %v725
        %v736 = vpack.c.b16 %v728, %v727
        %v737 = vpack.c.b16 %v730, %v729
        %v738 = vpack.c.b16 %v732, %v731
        %v739 = vpack.c.b16 %v734, %v733
        %vm740 = vcmask 654336
        %v742 = vsel %vm740, %v735, 0
        %v745 = vsel %vm740, %v736, 0
        %v748 = vsel %vm740, %v737, 0
        %v751 = vsel %vm740, %v738, 0
        %v754 = vsel %vm740, %v739, 0
        %756 = vmatprep.subr.bf16.mxu0 %v636
        %757 = vmatpush1.bf16.msra.mxu0 %v635
        %758 = vmatprep.subr.bf16.mxu0 %v638
        %759 = vmatpush1.bf16.msra.mxu0 %v637
        %760 = vmatprep.subr.bf16.mxu0 %v640
        %761 = vmatpush1.bf16.msra.mxu0 %v639
        %762 = vmatprep.subr.bf16.mxu0 %v642
        %763 = vmatpush1.bf16.msra.mxu0 %v641
        %764 = vmatprep.subr.bf16.mxu0 %v644
        %765 = vmatpush1.bf16.msra.mxu0 %v643
        %766 = vmatprep.subr.bf16.mxu0 0
        %767 = vmatpush1.bf16.msra.mxu0 0
        %768 = vmatprep.subr.bf16.mxu0 0
        %769 = vmatpush1.bf16.msra.mxu0 0
        %770 = vmatprep.subr.bf16.mxu0 0
        %771 = vmatpush1.bf16.msra.mxu0 0
        %772 = vmatprep.subr.bf16.mxu0 0
        %773 = vmatpush1.bf16.msra.mxu0 0
        %774 = vmatprep.subr.bf16.mxu0 0
        %775 = vmatpush1.bf16.msra.mxu0 0
        %776 = vmatprep.subr.bf16.mxu0 0
        %777 = vmatpush1.bf16.msra.mxu0 0
        %778 = vmatprep.subr.bf16.mxu0 0
        %779 = vmatpush1.bf16.msra.mxu0 0
        %780 = vmatprep.subr.bf16.mxu0 0
        %781 = vmatpush1.bf16.msra.mxu0 0
        %782 = vmatprep.subr.bf16.mxu0 0
        %783 = vmatpush1.bf16.msra.mxu0 0
        %784 = vmatprep.subr.bf16.mxu0 0
        %785 = vmatpush1.bf16.msra.mxu0 0
        %786 = vmatprep.subr.bf16.mxu0 0
        %787 = vmatpush1.bf16.msra.mxu0 0
        %788 = vmatprep.mubr.bf16.mxu0 0
        %789 = vmatmul.mubr.bf16.gmra.mrb[0].mxu0 %v742
        %v790 = vpop.f32.mrb[0].mxu0
        %v791 = vadd.f32 %v668, %v790
        %v792 = vpop.f32.mrb[0].mxu0
        %v793 = vadd.f32 %v668, %v792
        %v794 = vpop.f32.mrb[0].mxu0
        %v795 = vadd.f32 %v673, %v794
        %v796 = vpop.f32.mrb[0].mxu0
        %v797 = vadd.f32 %v673, %v796
        %798 = vmatprep.mubr.bf16.mxu0 0
        %799 = vmatmul.mubr.bf16.gmra.mrb[0].mxu0 %v745
        %v800 = vpop.f32.mrb[0].mxu0
        %v801 = vadd.f32 %v678, %v800
        %v802 = vpop.f32.mrb[0].mxu0
        %v803 = vadd.f32 %v678, %v802
        %v804 = vpop.f32.mrb[0].mxu0
        %v805 = vadd.f32 %v683, %v804
        %v806 = vpop.f32.mrb[0].mxu0
        %v807 = vadd.f32 %v683, %v806
        %808 = vmatprep.mubr.bf16.mxu0 0
        %809 = vmatmul.mubr.bf16.gmra.mrb[0].mxu0 %v748
        %v810 = vpop.f32.mrb[0].mxu0
        %v811 = vadd.f32 %v688, %v810
        %v812 = vpop.f32.mrb[0].mxu0
        %v813 = vadd.f32 %v688, %v812
        %v814 = vpop.f32.mrb[0].mxu0
        %v815 = vadd.f32 %v693, %v814
        %v816 = vpop.f32.mrb[0].mxu0
        %v817 = vadd.f32 %v693, %v816
        %818 = vmatprep.mubr.bf16.mxu0 0
        %819 = vmatmul.mubr.bf16.gmra.mrb[0].mxu0 %v751
        %v820 = vpop.f32.mrb[0].mxu0
        %v821 = vadd.f32 %v698, %v820
        %v822 = vpop.f32.mrb[0].mxu0
        %v823 = vadd.f32 %v698, %v822
        %v824 = vpop.f32.mrb[0].mxu0
        %v825 = vadd.f32 %v703, %v824
        %v826 = vpop.f32.mrb[0].mxu0
        %v827 = vadd.f32 %v703, %v826
        %828 = vmatprep.mubr.bf16.mxu0 0
        %829 = vmatmul.mubr.bf16.gmra.mrb[0].mxu0 %v754
        %v830 = vpop.f32.mrb[0].mxu0
        %v831 = vadd.f32 %v708, %v830
        %v832 = vpop.f32.mrb[0].mxu0
        %v833 = vadd.f32 %v708, %v832
        %v834 = vpop.f32.mrb[0].mxu0
        %v835 = vadd.f32 %v713, %v834
        %v836 = vpop.f32.mrb[0].mxu0
        %v837 = vadd.f32 %v713, %v836
        %838 = vdwg.mxu0
        %vm839 = vcmp.ge.f32.partialorder %v791, 0.0
        %vm840 = vcmp.ge.f32.partialorder %v793, 0.0
        %vm841 = vcmp.ge.f32.partialorder %v795, 0.0
        %vm842 = vcmp.ge.f32.partialorder %v797, 0.0
        %vm843 = vcmp.ge.f32.partialorder %v801, 0.0
        %vm844 = vcmp.ge.f32.partialorder %v803, 0.0
        %vm845 = vcmp.ge.f32.partialorder %v805, 0.0
        %vm846 = vcmp.ge.f32.partialorder %v807, 0.0
        %vm847 = vcmp.ge.f32.partialorder %v811, 0.0
        %vm848 = vcmp.ge.f32.partialorder %v813, 0.0
        %vm849 = vcmp.ge.f32.partialorder %v815, 0.0
        %vm850 = vcmp.ge.f32.partialorder %v817, 0.0
        %vm851 = vcmp.ge.f32.partialorder %v821, 0.0
        %vm852 = vcmp.ge.f32.partialorder %v823, 0.0
        %vm853 = vcmp.ge.f32.partialorder %v825, 0.0
        %vm854 = vcmp.ge.f32.partialorder %v827, 0.0
        %vm855 = vcmp.ge.f32.partialorder %v831, 0.0
        %vm856 = vcmp.ge.f32.partialorder %v833, 0.0
        %vm857 = vcmp.ge.f32.partialorder %v835, 0.0
        %vm858 = vcmp.ge.f32.partialorder %v837, 0.0
        %v859 = vmul.f32 %v791, 0.01
        %v860 = vmul.f32 %v793, 0.01
        %v861 = vmul.f32 %v795, 0.01
        %v862 = vmul.f32 %v797, 0.01
        %v863 = vmul.f32 %v801, 0.01
        %v864 = vmul.f32 %v803, 0.01
        %v865 = vmul.f32 %v805, 0.01
        %v866 = vmul.f32 %v807, 0.01
        %v867 = vmul.f32 %v811, 0.01
        %v868 = vmul.f32 %v813, 0.01
        %v869 = vmul.f32 %v815, 0.01
        %v870 = vmul.f32 %v817, 0.01
        %v871 = vmul.f32 %v821, 0.01
        %v872 = vmul.f32 %v823, 0.01
        %v873 = vmul.f32 %v825, 0.01
        %v874 = vmul.f32 %v827, 0.01
        %v875 = vmul.f32 %v831, 0.01
        %v876 = vmul.f32 %v833, 0.01
        %v877 = vmul.f32 %v835, 0.01
        %v878 = vmul.f32 %v837, 0.01
        %v879 = vsel %vm839, %v791, %v859
        %v880 = vsel %vm840, %v793, %v860
        %v881 = vsel %vm841, %v795, %v861
        %v882 = vsel %vm842, %v797, %v862
        %v883 = vsel %vm843, %v801, %v863
        %v884 = vsel %vm844, %v803, %v864
        %v885 = vsel %vm845, %v805, %v865
        %v886 = vsel %vm846, %v807, %v866
        %v887 = vsel %vm847, %v811, %v867
        %v888 = vsel %vm848, %v813, %v868
        %v889 = vsel %vm849, %v815, %v869
        %v890 = vsel %vm850, %v817, %v870
        %v891 = vsel %vm851, %v821, %v871
        %v892 = vsel %vm852, %v823, %v872
        %v893 = vsel %vm853, %v825, %v873
        %v894 = vsel %vm854, %v827, %v874
        %v895 = vsel %vm855, %v831, %v875
        %v896 = vsel %vm856, %v833, %v876
        %v897 = vsel %vm857, %v835, %v877
        %v898 = vsel %vm858, %v837, %v878
        %v899 = vpack.c.bf16 %v881, %v879
        %v900 = vpack.c.bf16 %v882, %v880
        %v901 = vpack.c.bf16 %v885, %v883
        %v902 = vpack.c.bf16 %v886, %v884
        %v903 = vpack.c.bf16 %v889, %v887
        %v904 = vpack.c.bf16 %v890, %v888
        %v905 = vpack.c.bf16 %v893, %v891
        %v906 = vpack.c.bf16 %v894, %v892
        %v907 = vpack.c.bf16 %v897, %v895
        %v908 = vpack.c.bf16 %v898, %v896
        %v909 = vld [vmem:[%s5] sm:$0xf]
        %v910 = vld [vmem:[%s5 + $0x4] sm:$0xf]
        %v911 = vld [vmem:[%s5 + $0x8] sm:$0xf]
        %v912 = vld [vmem:[%s5 + $0xc] sm:$0xf]
        %v913 = vld [vmem:[%s5 + $0x10] sm:$0xf]
        %v914 = vld [vmem:[%s5 + $0x14] sm:$0xf]
        %v915 = vld [vmem:[%s5 + $0x18] sm:$0xf]
        %v916 = vld [vmem:[%s5 + $0x1c] sm:$0xf]
        %v917 = vld [vmem:[%s5 + $0x20] sm:$0xf]
        %v918 = vld [vmem:[%s5 + $0x24] sm:$0xf]
        %v919 = vld [vmem:[%s5 + $0x28] sm:$0xf]
        %v920 = vld [vmem:[%s5 + $0x2c] sm:$0xf]
        %v921 = vld [vmem:[%s5 + $0x30] sm:$0xf]
        %v922 = vld [vmem:[%s5 + $0x34] sm:$0xf]
        %v923 = vld [vmem:[%s5 + $0x38] sm:$0xf]
        %v924 = vld [vmem:[%s5 + $0x3c] sm:$0xf]
        %v925 = vld [vmem:[%s5 + $0x40] sm:$0xf]
        %v926 = vld [vmem:[%s5 + $0x44] sm:$0xf]
        %v927 = vld [vmem:[%s5 + $0x48] sm:$0xf]
        %v928 = vld [vmem:[%s5 + $0x4c] sm:$0xf]
        %v929 = vld [vmem:[%s5 + $0x50] sm:$0xf]
        %v930 = vld [vmem:[%s5 + $0x54] sm:$0xf]
        %v931 = vld [vmem:[%s5 + $0x58] sm:$0xf]
        %v932 = vld [vmem:[%s5 + $0x5c] sm:$0xf]
        %v933 = vld [vmem:[%s5 + $0x60] sm:$0xf]
        %v934 = vld [vmem:[%s5 + $0x64] sm:$0xf]
        %v935 = vld [vmem:[%s5 + $0x68] sm:$0xf]
        %v936 = vld [vmem:[%s6] sm:$0xff]
        %v937 = vld [vmem:[%s6 + $0x8] sm:$0xff]
        %v938 = vld [vmem:[%s6 + $0x10] sm:$0xff]
        %v939 = vld [vmem:[%s6 + $0x18] sm:$0xff]
        %v940 = vld [vmem:[%s6 + $0x20] sm:$0xff]
        %v941 = vld [vmem:[%s6 + $0x28] sm:$0xff]
        %v942 = vld [vmem:[%s6 + $0x30] sm:$0xff]
        %v943 = vld [vmem:[%s6 + $0x38] sm:$0xff]
        %v944 = vld [vmem:[%s6 + $0x40] sm:$0xff]
        %v945 = vld [vmem:[%s6 + $0x48] sm:$0xff]
        %v946 = vld [vmem:[%s6 + $0x50] sm:$0xff]
        %v947 = vld [vmem:[%s6 + $0x58] sm:$0xff]
        %v948 = vld [vmem:[%s6 + $0x60] sm:$0xff]
        %v949 = vld [vmem:[%s6 + $0x68] sm:$0xff]
        %v950 = vld [vmem:[%s6 + $0x70] sm:$0xff]
        %v951 = vld [vmem:[%s6 + $0x78] sm:$0xff]
        %v952 = vld [vmem:[%s6 + $0x80] sm:$0xff]
        %v953 = vld [vmem:[%s6 + $0x88] sm:$0xff]
        %v954 = vld [vmem:[%s6 + $0x90] sm:$0xff]
        %v955 = vld [vmem:[%s6 + $0x98] sm:$0xff]
        %v956 = vld [vmem:[%s6 + $0xa0] sm:$0xff]
        %v957 = vld [vmem:[%s6 + $0xa8] sm:$0xff]
        %v958 = vld [vmem:[%s6 + $0xb0] sm:$0xff]
        %v959 = vld [vmem:[%s6 + $0xb8] sm:$0xff]
        %v960 = vld [vmem:[%s6 + $0xc0] sm:$0xff]
        %v961 = vld [vmem:[%s6 + $0xc8] sm:$0xff]
        %v962 = vld [vmem:[%s6 + $0xd0] sm:$0xff]
        %964 = vset.pattern.permute.xlu0 0
        %965 = vperm.xlu0 %964, %v936
        %v966 = vpop.permute.xlu0 %965
        %969 = vset.pattern.permute.xlu0 0
        %970 = vperm.xlu0 %969, %v937
        %v971 = vpop.permute.xlu0 %970
        %974 = vset.pattern.permute.xlu0 0
        %975 = vperm.xlu0 %974, %v938
        %v976 = vpop.permute.xlu0 %975
        %979 = vset.pattern.permute.xlu0 0
        %980 = vperm.xlu0 %979, %v939
        %v981 = vpop.permute.xlu0 %980
        %984 = vset.pattern.permute.xlu0 0
        %985 = vperm.xlu0 %984, %v940
        %v986 = vpop.permute.xlu0 %985
        %989 = vset.pattern.permute.xlu0 0
        %990 = vperm.xlu0 %989, %v941
        %v991 = vpop.permute.xlu0 %990
        %994 = vset.pattern.permute.xlu0 0
        %995 = vperm.xlu0 %994, %v942
        %v996 = vpop.permute.xlu0 %995
        %999 = vset.pattern.permute.xlu0 0
        %1000 = vperm.xlu0 %999, %v943
        %v1001 = vpop.permute.xlu0 %1000
        %1004 = vset.pattern.permute.xlu0 0
        %1005 = vperm.xlu0 %1004, %v944
        %v1006 = vpop.permute.xlu0 %1005
        %1009 = vset.pattern.permute.xlu0 0
        %1010 = vperm.xlu0 %1009, %v945
        %v1011 = vpop.permute.xlu0 %1010
        %1014 = vset.pattern.permute.xlu0 0
        %1015 = vperm.xlu0 %1014, %v946
        %v1016 = vpop.permute.xlu0 %1015
        %1019 = vset.pattern.permute.xlu0 0
        %1020 = vperm.xlu0 %1019, %v947
        %v1021 = vpop.permute.xlu0 %1020
        %1024 = vset.pattern.permute.xlu0 0
        %1025 = vperm.xlu0 %1024, %v948
        %v1026 = vpop.permute.xlu0 %1025
        %1029 = vset.pattern.permute.xlu0 0
        %1030 = vperm.xlu0 %1029, %v949
        %v1031 = vpop.permute.xlu0 %1030
        %1034 = vset.pattern.permute.xlu0 0
        %1035 = vperm.xlu0 %1034, %v950
        %v1036 = vpop.permute.xlu0 %1035
        %1039 = vset.pattern.permute.xlu0 0
        %1040 = vperm.xlu0 %1039, %v951
        %v1041 = vpop.permute.xlu0 %1040
        %1044 = vset.pattern.permute.xlu0 0
        %1045 = vperm.xlu0 %1044, %v952
        %v1046 = vpop.permute.xlu0 %1045
        %1049 = vset.pattern.permute.xlu0 0
        %1050 = vperm.xlu0 %1049, %v953
        %v1051 = vpop.permute.xlu0 %1050
        %1054 = vset.pattern.permute.xlu0 0
        %1055 = vperm.xlu0 %1054, %v954
        %v1056 = vpop.permute.xlu0 %1055
        %1059 = vset.pattern.permute.xlu0 0
        %1060 = vperm.xlu0 %1059, %v955
        %v1061 = vpop.permute.xlu0 %1060
        %1064 = vset.pattern.permute.xlu0 0
        %1065 = vperm.xlu0 %1064, %v956
        %v1066 = vpop.permute.xlu0 %1065
        %1069 = vset.pattern.permute.xlu0 0
        %1070 = vperm.xlu0 %1069, %v957
        %v1071 = vpop.permute.xlu0 %1070
        %1074 = vset.pattern.permute.xlu0 0
        %1075 = vperm.xlu0 %1074, %v958
        %v1076 = vpop.permute.xlu0 %1075
        %1079 = vset.pattern.permute.xlu0 0
        %1080 = vperm.xlu0 %1079, %v959
        %v1081 = vpop.permute.xlu0 %1080
        %1084 = vset.pattern.permute.xlu0 0
        %1085 = vperm.xlu0 %1084, %v960
        %v1086 = vpop.permute.xlu0 %1085
        %1089 = vset.pattern.permute.xlu0 0
        %1090 = vperm.xlu0 %1089, %v961
        %v1091 = vpop.permute.xlu0 %1090
        %1094 = vset.pattern.permute.xlu0 0
        %1095 = vperm.xlu0 %1094, %v962
        %v1096 = vpop.permute.xlu0 %1095
        %v1125 = vunpack.c.l.b16 %v909
        %v1126 = vunpack.c.l.b16 %v910
        %v1127 = vunpack.c.l.b16 %v911
        %v1128 = vunpack.c.l.b16 %v912
        %v1129 = vunpack.c.l.b16 %v913
        %v1130 = vunpack.c.l.b16 %v914
        %v1131 = vunpack.c.l.b16 %v915
        %v1132 = vunpack.c.l.b16 %v916
        %v1133 = vunpack.c.l.b16 %v917
        %v1134 = vunpack.c.l.b16 %v918
        %v1135 = vunpack.c.l.b16 %v919
        %v1136 = vunpack.c.l.b16 %v920
        %v1137 = vunpack.c.l.b16 %v921
        %v1138 = vunpack.c.l.b16 %v922
        %v1139 = vunpack.c.l.b16 %v923
        %v1140 = vunpack.c.l.b16 %v924
        %v1141 = vunpack.c.l.b16 %v925
        %v1142 = vunpack.c.l.b16 %v926
        %v1143 = vunpack.c.l.b16 %v927
        %v1144 = vunpack.c.l.b16 %v928
        %v1145 = vunpack.c.l.b16 %v929
        %v1146 = vunpack.c.l.b16 %v930
        %v1147 = vunpack.c.l.b16 %v931
        %v1148 = vunpack.c.l.b16 %v932
        %v1149 = vunpack.c.l.b16 %v933
        %v1150 = vunpack.c.l.b16 %v934
        %v1151 = vunpack.c.l.b16 %v935
        %v1152 = vpack.c.b16 %v1126, %v1125
        %v1153 = vpack.c.b16 %v1128, %v1127
        %v1154 = vpack.c.b16 %v1130, %v1129
        %v1155 = vpack.c.b16 %v1132, %v1131
        %v1156 = vpack.c.b16 %v1134, %v1133
        %v1157 = vpack.c.b16 %v1136, %v1135
        %v1158 = vpack.c.b16 %v1138, %v1137
        %v1159 = vpack.c.b16 %v1140, %v1139
        %v1160 = vpack.c.b16 %v1142, %v1141
        %v1161 = vpack.c.b16 %v1144, %v1143
        %v1162 = vpack.c.b16 %v1146, %v1145
        %v1163 = vpack.c.b16 %v1148, %v1147
        %v1164 = vpack.c.b16 %v1150, %v1149
        %v1165 = vpack.c.b16 %v1151, %v1151
        %v1167 = vsel %vm740, %v1152, 0
        %v1170 = vsel %vm740, %v1153, 0
        %v1173 = vsel %vm740, %v1154, 0
        %v1176 = vsel %vm740, %v1155, 0
        %v1179 = vsel %vm740, %v1156, 0
        %v1182 = vsel %vm740, %v1157, 0
        %v1185 = vsel %vm740, %v1158, 0
        %v1188 = vsel %vm740, %v1159, 0
        %v1191 = vsel %vm740, %v1160, 0
        %v1194 = vsel %vm740, %v1161, 0
        %v1197 = vsel %vm740, %v1162, 0
        %v1200 = vsel %vm740, %v1163, 0
        %v1203 = vsel %vm740, %v1164, 0
        %v1206 = vsel %vm740, %v1165, 0
        %1208 = vmatprep.subr.bf16.mxu0 %v900
        %1209 = vmatpush1.bf16.msra.mxu0 %v899
        %1210 = vmatprep.subr.bf16.mxu0 %v902
        %1211 = vmatpush1.bf16.msra.mxu0 %v901
        %1212 = vmatprep.subr.bf16.mxu0 %v904
        %1213 = vmatpush1.bf16.msra.mxu0 %v903
        %1214 = vmatprep.subr.bf16.mxu0 %v906
        %1215 = vmatpush1.bf16.msra.mxu0 %v905
        %1216 = vmatprep.subr.bf16.mxu0 %v908
        %1217 = vmatpush1.bf16.msra.mxu0 %v907
        %1218 = vmatprep.subr.bf16.mxu0 0
        %1219 = vmatpush1.bf16.msra.mxu0 0
        %1220 = vmatprep.subr.bf16.mxu0 0
        %1221 = vmatpush1.bf16.msra.mxu0 0
        %1222 = vmatprep.subr.bf16.mxu0 0
        %1223 = vmatpush1.bf16.msra.mxu0 0
        %1224 = vmatprep.subr.bf16.mxu0 0
        %1225 = vmatpush1.bf16.msra.mxu0 0
        %1226 = vmatprep.subr.bf16.mxu0 0
        %1227 = vmatpush1.bf16.msra.mxu0 0
        %1228 = vmatprep.subr.bf16.mxu0 0
        %1229 = vmatpush1.bf16.msra.mxu0 0
        %1230 = vmatprep.subr.bf16.mxu0 0
        %1231 = vmatpush1.bf16.msra.mxu0 0
        %1232 = vmatprep.subr.bf16.mxu0 0
        %1233 = vmatpush1.bf16.msra.mxu0 0
        %1234 = vmatprep.subr.bf16.mxu0 0
        %1235 = vmatpush1.bf16.msra.mxu0 0
        %1236 = vmatprep.subr.bf16.mxu0 0
        %1237 = vmatpush1.bf16.msra.mxu0 0
        %1238 = vmatprep.subr.bf16.mxu0 0
        %1239 = vmatpush1.bf16.msra.mxu0 0
        %1240 = vmatprep.mubr.bf16.mxu0 0
        %1241 = vmatmul.mubr.bf16.gmra.mrb[0].mxu0 %v1167
        %v1242 = vpop.f32.mrb[0].mxu0
        %v1243 = vadd.f32 %v966, %v1242
        %v1244 = vpop.f32.mrb[0].mxu0
        %v1245 = vadd.f32 %v966, %v1244
        %v1246 = vpop.f32.mrb[0].mxu0
        %v1247 = vadd.f32 %v971, %v1246
        %v1248 = vpop.f32.mrb[0].mxu0
        %v1249 = vadd.f32 %v971, %v1248
        %1250 = vmatprep.mubr.bf16.mxu0 0
        %1251 = vmatmul.mubr.bf16.gmra.mrb[0].mxu0 %v1170
        %v1252 = vpop.f32.mrb[0].mxu0
        %v1253 = vadd.f32 %v976, %v1252
        %v1254 = vpop.f32.mrb[0].mxu0
        %v1255 = vadd.f32 %v976, %v1254
        %v1256 = vpop.f32.mrb[0].mxu0
        %v1257 = vadd.f32 %v981, %v1256
        %v1258 = vpop.f32.mrb[0].mxu0
        %v1259 = vadd.f32 %v981, %v1258
        %1260 = vmatprep.mubr.bf16.mxu0 0
        %1261 = vmatmul.mubr.bf16.gmra.mrb[0].mxu0 %v1173
        %v1262 = vpop.f32.mrb[0].mxu0
        %v1263 = vadd.f32 %v986, %v1262
        %v1264 = vpop.f32.mrb[0].mxu0
        %v1265 = vadd.f32 %v986, %v1264
        %v1266 = vpop.f32.mrb[0].mxu0
        %v1267 = vadd.f32 %v991, %v1266
        %v1268 = vpop.f32.mrb[0].mxu0
        %v1269 = vadd.f32 %v991, %v1268
        %1270 = vmatprep.mubr.bf16.mxu0 0
        %1271 = vmatmul.mubr.bf16.gmra.mrb[0].mxu0 %v1176
        %v1272 = vpop.f32.mrb[0].mxu0
        %v1273 = vadd.f32 %v996, %v1272
        %v1274 = vpop.f32.mrb[0].mxu0
        %v1275 = vadd.f32 %v996, %v1274
        %v1276 = vpop.f32.mrb[0].mxu0
        %v1277 = vadd.f32 %v1001, %v1276
        %v1278 = vpop.f32.mrb[0].mxu0
        %v1279 = vadd.f32 %v1001, %v1278
        %1280 = vmatprep.mubr.bf16.mxu0 0
        %1281 = vmatmul.mubr.bf16.gmra.mrb[0].mxu0 %v1179
        %v1282 = vpop.f32.mrb[0].mxu0
        %v1283 = vadd.f32 %v1006, %v1282
        %v1284 = vpop.f32.mrb[0].mxu0
        %v1285 = vadd.f32 %v1006, %v1284
        %v1286 = vpop.f32.mrb[0].mxu0
        %v1287 = vadd.f32 %v1011, %v1286
        %v1288 = vpop.f32.mrb[0].mxu0
        %v1289 = vadd.f32 %v1011, %v1288
        %1290 = vmatprep.mubr.bf16.mxu0 0
        %1291 = vmatmul.mubr.bf16.gmra.mrb[0].mxu0 %v1182
        %v1292 = vpop.f32.mrb[0].mxu0
        %v1293 = vadd.f32 %v1016, %v1292
        %v1294 = vpop.f32.mrb[0].mxu0
        %v1295 = vadd.f32 %v1016, %v1294
        %v1296 = vpop.f32.mrb[0].mxu0
        %v1297 = vadd.f32 %v1021, %v1296
        %v1298 = vpop.f32.mrb[0].mxu0
        %v1299 = vadd.f32 %v1021, %v1298
        %1300 = vmatprep.mubr.bf16.mxu0 0
        %1301 = vmatmul.mubr.bf16.gmra.mrb[0].mxu0 %v1185
        %v1302 = vpop.f32.mrb[0].mxu0
        %v1303 = vadd.f32 %v1026, %v1302
        %v1304 = vpop.f32.mrb[0].mxu0
        %v1305 = vadd.f32 %v1026, %v1304
        %v1306 = vpop.f32.mrb[0].mxu0
        %v1307 = vadd.f32 %v1031, %v1306
        %v1308 = vpop.f32.mrb[0].mxu0
        %v1309 = vadd.f32 %v1031, %v1308
        %1310 = vmatprep.mubr.bf16.mxu0 0
        %1311 = vmatmul.mubr.bf16.gmra.mrb[0].mxu0 %v1188
        %v1312 = vpop.f32.mrb[0].mxu0
        %v1313 = vadd.f32 %v1036, %v1312
        %v1314 = vpop.f32.mrb[0].mxu0
        %v1315 = vadd.f32 %v1036, %v1314
        %v1316 = vpop.f32.mrb[0].mxu0
        %v1317 = vadd.f32 %v1041, %v1316
        %v1318 = vpop.f32.mrb[0].mxu0
        %v1319 = vadd.f32 %v1041, %v1318
        %1320 = vmatprep.mubr.bf16.mxu0 0
        %1321 = vmatmul.mubr.bf16.gmra.mrb[0].mxu0 %v1191
        %v1322 = vpop.f32.mrb[0].mxu0
        %v1323 = vadd.f32 %v1046, %v1322
        %v1324 = vpop.f32.mrb[0].mxu0
        %v1325 = vadd.f32 %v1046, %v1324
        %v1326 = vpop.f32.mrb[0].mxu0
        %v1327 = vadd.f32 %v1051, %v1326
        %v1328 = vpop.f32.mrb[0].mxu0
        %v1329 = vadd.f32 %v1051, %v1328
        %1330 = vmatprep.mubr.bf16.mxu0 0
        %1331 = vmatmul.mubr.bf16.gmra.mrb[0].mxu0 %v1194
        %v1332 = vpop.f32.mrb[0].mxu0
        %v1333 = vadd.f32 %v1056, %v1332
        %v1334 = vpop.f32.mrb[0].mxu0
        %v1335 = vadd.f32 %v1056, %v1334
        %v1336 = vpop.f32.mrb[0].mxu0
        %v1337 = vadd.f32 %v1061, %v1336
        %v1338 = vpop.f32.mrb[0].mxu0
        %v1339 = vadd.f32 %v1061, %v1338
        %1340 = vmatprep.mubr.bf16.mxu0 0
        %1341 = vmatmul.mubr.bf16.gmra.mrb[0].mxu0 %v1197
        %v1342 = vpop.f32.mrb[0].mxu0
        %v1343 = vadd.f32 %v1066, %v1342
        %v1344 = vpop.f32.mrb[0].mxu0
        %v1345 = vadd.f32 %v1066, %v1344
        %v1346 = vpop.f32.mrb[0].mxu0
        %v1347 = vadd.f32 %v1071, %v1346
        %v1348 = vpop.f32.mrb[0].mxu0
        %v1349 = vadd.f32 %v1071, %v1348
        %1350 = vmatprep.mubr.bf16.mxu0 0
        %1351 = vmatmul.mubr.bf16.gmra.mrb[0].mxu0 %v1200
        %v1352 = vpop.f32.mrb[0].mxu0
        %v1353 = vadd.f32 %v1076, %v1352
        %v1354 = vpop.f32.mrb[0].mxu0
        %v1355 = vadd.f32 %v1076, %v1354
        %v1356 = vpop.f32.mrb[0].mxu0
        %v1357 = vadd.f32 %v1081, %v1356
        %v1358 = vpop.f32.mrb[0].mxu0
        %v1359 = vadd.f32 %v1081, %v1358
        %1360 = vmatprep.mubr.bf16.mxu0 0
        %1361 = vmatmul.mubr.bf16.gmra.mrb[0].mxu0 %v1203
        %v1362 = vpop.f32.mrb[0].mxu0
        %v1363 = vadd.f32 %v1086, %v1362
        %v1364 = vpop.f32.mrb[0].mxu0
        %v1365 = vadd.f32 %v1086, %v1364
        %v1366 = vpop.f32.mrb[0].mxu0
        %v1367 = vadd.f32 %v1091, %v1366
        %v1368 = vpop.f32.mrb[0].mxu0
        %v1369 = vadd.f32 %v1091, %v1368
        %1370 = vmatprep.mubr.bf16.mxu0 0
        %1371 = vmatmul.mubr.bf16.gmra.mrb[0].mxu0 %v1206
        %v1372 = vpop.f32.mrb[0].mxu0
        %v1373 = vadd.f32 %v1096, %v1372
        %v1374 = vpop.f32.mrb[0].mxu0
        %v1375 = vadd.f32 %v1096, %v1374
        %v1376 = vpop.f32.mrb[0].mxu0
        %v1377 = vpop.f32.mrb[0].mxu0
        %1378 = vdwg.mxu0
        %1379 = vst [vmem:[%s296] sm:$0xff] %v1243
        %1380 = vst [vmem:[%s296 + $0x8] sm:$0xff] %v1245
        %1381 = vst [vmem:[%s296 + $0x10] sm:$0xff] %v1247
        %1382 = vst [vmem:[%s296 + $0x18] sm:$0xff] %v1249
        %1383 = vst [vmem:[%s296 + $0x20] sm:$0xff] %v1253
        %1384 = vst [vmem:[%s296 + $0x28] sm:$0xff] %v1255
        %1385 = vst [vmem:[%s296 + $0x30] sm:$0xff] %v1257
        %1386 = vst [vmem:[%s296 + $0x38] sm:$0xff] %v1259
        %1387 = vst [vmem:[%s296 + $0x40] sm:$0xff] %v1263
        %1388 = vst [vmem:[%s296 + $0x48] sm:$0xff] %v1265
        %1389 = vst [vmem:[%s296 + $0x50] sm:$0xff] %v1267
        %1390 = vst [vmem:[%s296 + $0x58] sm:$0xff] %v1269
        %1391 = vst [vmem:[%s296 + $0x60] sm:$0xff] %v1273
        %1392 = vst [vmem:[%s296 + $0x68] sm:$0xff] %v1275
        %1393 = vst [vmem:[%s296 + $0x70] sm:$0xff] %v1277
        %1394 = vst [vmem:[%s296 + $0x78] sm:$0xff] %v1279
        %1395 = vst [vmem:[%s296 + $0x80] sm:$0xff] %v1283
        %1396 = vst [vmem:[%s296 + $0x88] sm:$0xff] %v1285
        %1397 = vst [vmem:[%s296 + $0x90] sm:$0xff] %v1287
        %1398 = vst [vmem:[%s296 + $0x98] sm:$0xff] %v1289
        %1399 = vst [vmem:[%s296 + $0xa0] sm:$0xff] %v1293
        %1400 = vst [vmem:[%s296 + $0xa8] sm:$0xff] %v1295
        %1401 = vst [vmem:[%s296 + $0xb0] sm:$0xff] %v1297
        %1402 = vst [vmem:[%s296 + $0xb8] sm:$0xff] %v1299
        %1403 = vst [vmem:[%s296 + $0xc0] sm:$0xff] %v1303
        %1404 = vst [vmem:[%s296 + $0xc8] sm:$0xff] %v1305
        %1405 = vst [vmem:[%s296 + $0xd0] sm:$0xff] %v1307
        %1406 = vst [vmem:[%s296 + $0xd8] sm:$0xff] %v1309
        %1407 = vst [vmem:[%s296 + $0xe0] sm:$0xff] %v1313
        %1408 = vst [vmem:[%s296 + $0xe8] sm:$0xff] %v1315
        %1409 = vst [vmem:[%s296 + $0xf0] sm:$0xff] %v1317
        %1410 = vst [vmem:[%s296 + $0xf8] sm:$0xff] %v1319
        %1411 = vst [vmem:[%s296 + $0x100] sm:$0xff] %v1323
        %1412 = vst [vmem:[%s296 + $0x108] sm:$0xff] %v1325
        %1413 = vst [vmem:[%s296 + $0x110] sm:$0xff] %v1327
        %1414 = vst [vmem:[%s296 + $0x118] sm:$0xff] %v1329
        %1415 = vst [vmem:[%s296 + $0x120] sm:$0xff] %v1333
        %1416 = vst [vmem:[%s296 + $0x128] sm:$0xff] %v1335
        %1417 = vst [vmem:[%s296 + $0x130] sm:$0xff] %v1337
        %1418 = vst [vmem:[%s296 + $0x138] sm:$0xff] %v1339
        %1419 = vst [vmem:[%s296 + $0x140] sm:$0xff] %v1343
        %1420 = vst [vmem:[%s296 + $0x148] sm:$0xff] %v1345
        %1421 = vst [vmem:[%s296 + $0x150] sm:$0xff] %v1347
        %1422 = vst [vmem:[%s296 + $0x158] sm:$0xff] %v1349
        %1423 = vst [vmem:[%s296 + $0x160] sm:$0xff] %v1353
        %1424 = vst [vmem:[%s296 + $0x168] sm:$0xff] %v1355
        %1425 = vst [vmem:[%s296 + $0x170] sm:$0xff] %v1357
        %1426 = vst [vmem:[%s296 + $0x178] sm:$0xff] %v1359
        %1427 = vst [vmem:[%s296 + $0x180] sm:$0xff] %v1363
        %1428 = vst [vmem:[%s296 + $0x188] sm:$0xff] %v1365
        %1429 = vst [vmem:[%s296 + $0x190] sm:$0xff] %v1367
        %1430 = vst [vmem:[%s296 + $0x198] sm:$0xff] %v1369
        %1431 = vst [vmem:[%s296 + $0x1a0] sm:$0xff] %v1373
        %1432 = vst [vmem:[%s296 + $0x1a8] sm:$0xff] %v1375
        %s1433 = sand.u32 %s197, 1
        %s1434 = scalar_lea.sflag [#allocation3], %s1433
        %s1435 = sand.u32 %s197, 1
        %s1436 = smul.addr %s1435, 432
        %s1437 = scalar_lea.vmem [#allocation2], %s1436
        // Predicated region
        $region49: #{tpu_custom_call.1} parent=47 // pred_check
          %p1438 = pneg %p207
        $region50: #{tpu_custom_call.1} parent=47 // pred_check_branch
          %1440 = sbr.rel (%p1438) target = $region52
        $region51: #{tpu_custom_call.1} parent=47 // pred_region
          %s1441 = smul.u32 2, %s26
          %s1443 = ssub.s32 6912, 6912
          %1444 = vsyncadd %s1434, %s1443
          %s1445 = smul.addr %s25, 54
          %s1446 = sadd.s32 %s1441, %s1445
          %s1447 = smul.addr %s1446, 128
          %s1448 = scalar_lea.hbm %s7, %s1447
          %s1449 = sshll.u32 %s1437, 4
          %s1450 = int_to_ptr.vmem [resolvable:$true] %s1449
          %1455 = dma.vmem_to_hbm [thread:$0]  %s1450, 6912, %s1448, %s1434, 256, 256, 16
        $region52: #{tpu_custom_call.1} parent=47 // pred_fallthru
          _
      $region48: #{tpu_custom_call.1} parent=5 // pred_fallthru
        _
      %p1456 = scmp.le.s32.totalorder 2, %s16
      // Predicated region
      $region53: #{tpu_custom_call.1} parent=5 // pred_check
        %p1457 = pneg %p1456
      $region54: #{tpu_custom_call.1} parent=5 // pred_check_branch
        %1459 = sbr.rel (%p1457) target = $region56
      $region55: #{tpu_custom_call.1} parent=5 // pred_region
        %s1460 = ssub.s32 %s16, 2
        // Predicated region
        $region57: #{tpu_custom_call.1} parent=55 // pred_check
          %p1461 = pneg %p213
        $region58: #{tpu_custom_call.1} parent=55 // pred_check_branch
          %1463 = sbr.rel (%p1461) target = $region60
        $region59: #{tpu_custom_call.1} parent=55 // pred_region
          %s1464 = sand.u32 %s198, 1
          %s1465 = scalar_lea.sflag [#allocation3], %s1464
          %s1466 = sand.u32 %s198, 1
          %s1467 = smul.addr %s1466, 432
          %s1468 = scalar_lea.vmem [#allocation2], %s1467
          %1469 = dma.done %s1465, 6912
        $region60: #{tpu_custom_call.1} parent=55 // pred_fallthru
          _
      $region56: #{tpu_custom_call.1} parent=5 // pred_fallthru
        _
    $region6: #{tpu_custom_call.1} parent=1 // loop_footer
      %s20 = sadd.s32 1, %s16
    $region7: #{tpu_custom_call.1} parent=1 // loop_footer_branch
      %15 = sbr.rel target = $region3
    $region8: #{tpu_custom_call.1} parent=1 // loop_exit
      _
    %1470 = vsyncpa [#allocation3], 1
    %s1471 = scalar_lea.sflag [#allocation3], 1
    %1472 = vsyncpa %s1471, 1

</llo_original>
